<compile_context>
chip_gen: v6e
topology: v6e:2x2x1
jax: 0.10.0
libtpu: 0.0.40
codegen_flags: <defaults>
</compile_context>

<pallas_src>
import functools

import jax
import jax.numpy as jnp
from jax import lax
from jax.experimental import pallas as pl
from jax.experimental.pallas import tpu as pltpu


def _round_up(v, m):
    return ((v + m - 1) // m) * m


def _cdiv(a, b):
    return (a + b - 1) // b


def _mxu_rows():
    """Systolic-array height: 128 on v2-v5, 256 on v6e/v7x (best-effort probe)."""
    try:
        kind = jax.devices()[0].device_kind.lower()
        if any(tag in kind for tag in ("v2", "v3", "v4", "v5")):
            return 128
    except Exception:
        pass
    return 256


def _cos_sim_kernel(x_ref, y_ref, xn_ref, yn_ref, o_ref, acc_ref,
                    *, inv_temp, eps, mxu_dtype):
    # x_ref : (tm, tk)   input dtype  — K-slice of the x row tile
    # y_ref : (tn, tk)   input dtype  — K-slice of the y col tile
    # xn_ref: (tm, 1)    f32 row norms of x (unclamped)
    # yn_ref: (1, tn)    f32 row norms of y (unclamped)
    # o_ref : (tm, tn)   f32 output
    # acc_ref:(tm, tn)   f32 accumulator scratch, resident across the K axis
    k = pl.program_id(2)

    @pl.when(k == 0)
    def _():
        acc_ref[...] = jnp.zeros_like(acc_ref)

    a = x_ref[...]
    b = y_ref[...]
    if mxu_dtype is not None:                 # opt-in bf16 MXU operands
        a = a.astype(mxu_dtype)
        b = b.astype(mxu_dtype)
    acc_ref[...] += lax.dot_general(
        a, b,
        dimension_numbers=(((1,), (1,)), ((), ())),   # contract last axes
        preferred_element_type=jnp.float32,
    )

    @pl.when(k == pl.num_programs(2) - 1)
    def _():
        # PyTorch CosineSimilarity clamps the *product* of the norms with eps.
        denom = jnp.maximum(xn_ref[...] * yn_ref[...], eps)
        o_ref[...] = (acc_ref[...] / denom) * inv_temp


def similarity(x, y, temp, *, eps=1e-8, tm_max=None, tn_max=512, tk_max=2048,
               mxu_dtype=None):
    """Pallas equivalent of Similarity.forward.

    Accepts x of shape [B, 1, H] (or [B, H]) and y of shape [1, B, H]
    (or [B, H]); returns the broadcasted cosine-similarity matrix
    [B_x, B_y] divided by `temp`, as float32.
    """
    assert eps > 0.0, "eps must be > 0 (padded rows would otherwise emit NaNs)"

    x2 = x.reshape(-1, x.shape[-1])
    y2 = y.reshape(-1, y.shape[-1])
    B_x, H = x2.shape
    B_y, H_y = y2.shape
    assert H == H_y, "x and y must share the hidden dimension"

    # --- Row norms (tiny XLA reductions; convert fuses into the reduction). --
    # TODO(synk): for strictly mem-bound problems fold these reductions into
    # the kernel's K loop (they currently cost one extra HBM read of x and y).
    x_norm = jnp.sqrt(jnp.sum(jnp.square(x2.astype(jnp.float32)),
                              axis=-1, keepdims=True))          # (B_x, 1)
    y_norm = jnp.sqrt(jnp.sum(jnp.square(y2.astype(jnp.float32)),
                              axis=-1, keepdims=True)).reshape(1, B_y)  # (1, B_y)

    # --- Tile selection -------------------------------------------------------
    mxu_rows = _mxu_rows()
    if tm_max is None:
        tm_max = mxu_rows
    in_itemsize = jnp.dtype(x2.dtype).itemsize

    # Row tile: fill the MXU height; col tile: lane-dense multiple of 128.
    tm = max(8, min(tm_max, _round_up(B_x, mxu_rows)))
    tn = max(128, min(tn_max, _round_up(B_y, 128)))

    # K tile: 128-aligned, chosen so the padded H splits into nk equal blocks.
    Hp0 = _round_up(H, 128)
    nk = _cdiv(Hp0, max(128, tk_max))
    tk = _round_up(_cdiv(Hp0, nk), 128)

    # VMEM working-set estimate (double-buffered in/out + accumulator scratch).
    def vmem_bytes(tm_, tn_, tk_):
        return (2 * (tm_ + tn_) * tk_ * in_itemsize   # x/y tiles, double-buffered
                + 2 * tm_ * tn_ * 4                   # out tile (f32), double-buffered
                + tm_ * tn_ * 4                       # f32 accumulator
                + 4 * (tm_ + tn_) * 4)                # norm side inputs (tiny)

    VMEM_TARGET = 40 * (1 << 20)   # ~30% headroom under v7x's 64 MiB physical VMEM
    while vmem_bytes(tm, tn, tk) > VMEM_TARGET and tk > 128:
        nk += 1
        tk = _round_up(_cdiv(Hp0, nk), 128)
    while vmem_bytes(tm, tn, tk) > VMEM_TARGET and tn > 128:
        tn //= 2
    while vmem_bytes(tm, tn, tk) > VMEM_TARGET and tm > 8:
        tm //= 2

    Hp = nk * tk
    Bx_p = _round_up(B_x, tm)
    By_p = _round_up(B_y, tn)

    # Megacore (v7x 2 TCs): ensure >= 2 blocks along a parallel axis when the
    # lane axis can be split while staying a multiple of 128.
    if (Bx_p // tm) * (By_p // tn) < 2 and tn >= 256 and tn % 256 == 0:
        tn //= 2
        By_p = _round_up(B_y, tn)

    # --- Zero padding (padded K contributes 0 to the dot products). ----------
    def _pad2(a, rows, cols):
        pr, pc = rows - a.shape[0], cols - a.shape[1]
        return a if (pr == 0 and pc == 0) else jnp.pad(a, ((0, pr), (0, pc)))

    x_p = _pad2(x2, Bx_p, Hp)
    y_p = _pad2(y2, By_p, Hp)
    xn_p = _pad2(x_norm, Bx_p, 1)          # padded rows: norm 0 -> output 0
    yn_p = _pad2(y_norm, 1, By_p)

    grid = (Bx_p // tm, By_p // tn, Hp // tk)
    # NOTE: y is re-streamed from HBM once per row block (Bx_p/tm times); for
    # very large B raise tm_max / tn_max to cut the replay factor.

    est = vmem_bytes(tm, tn, tk)
    vmem_limit = int(min(60 * (1 << 20), max(est + (8 << 20), 16 << 20)))

    kernel = functools.partial(
        _cos_sim_kernel,
        inv_temp=1.0 / float(temp),
        eps=float(eps),
        mxu_dtype=mxu_dtype,
    )

    out_p = pl.pallas_call(
        kernel,
        out_shape=jax.ShapeDtypeStruct((Bx_p, By_p), jnp.float32),
        grid_spec=pltpu.PrefetchScalarGridSpec(
            num_scalar_prefetch=0,
            grid=grid,
            in_specs=[
                pl.BlockSpec((tm, tk), lambda i, j, k: (i, k)),   # x K-slice
                pl.BlockSpec((tn, tk), lambda i, j, k: (j, k)),   # y K-slice
                pl.BlockSpec((tm, 1), lambda i, j, k: (i, 0)),    # ||x|| rows
                pl.BlockSpec((1, tn), lambda i, j, k: (0, j)),    # ||y|| rows
            ],
            out_specs=pl.BlockSpec((tm, tn), lambda i, j, k: (i, j)),
            scratch_shapes=[pltpu.VMEM((tm, tn), jnp.float32)],
        ),
        compiler_params=pltpu.CompilerParams(
            dimension_semantics=("parallel", "parallel", "arbitrary"),
            vmem_limit_bytes=vmem_limit,
        ),
    )(x_p, y_p, xn_p, yn_p)

    return out_p[:B_x, :B_y]


def _reference(x, y, temp, eps=1e-8):
    x2 = x.reshape(-1, x.shape[-1]).astype(jnp.float32)
    y2 = y.reshape(-1, y.shape[-1]).astype(jnp.float32)
    xn = jnp.linalg.norm(x2, axis=-1, keepdims=True)
    yn = jnp.linalg.norm(y2, axis=-1, keepdims=True)
    dots = x2 @ y2.T
    return dots / jnp.maximum(xn * yn.T, eps) / temp


if __name__ == "__main__":
    key = jax.random.PRNGKey(0)
    temp = 0.05  # typical SimCSE temperature

    # Case 1: SimCSE call convention, f32, small batch.
    k1, k2, k3, k4, k5, k6 = jax.random.split(key, 6)
    B, H = 8, 32
    x = jax.random.normal(k1, (B, 1, H), dtype=jnp.float32)
    y = jax.random.normal(k2, (1, B, H), dtype=jnp.float32)
    out = jax.block_until_ready(similarity(x, y, temp))
    ref = _reference(x, y, temp)
    assert out.shape == (B, B)
    assert jnp.allclose(out, ref, atol=1e-4, rtol=1e-4), "f32 mismatch vs reference"

    # Case 2: non-aligned batch + bf16 embeddings (padding + bf16 MXU path).
    B2, H2 = 10, 32
    xb = jax.random.normal(k3, (B2, 1, H2), dtype=jnp.bfloat16)
    yb = jax.random.normal(k4, (1, B2, H2), dtype=jnp.bfloat16)
    out2 = jax.block_until_ready(similarity(xb, yb, temp))
    ref2 = _reference(xb, yb, temp)
    assert out2.shape == (B2, B2)
    assert jnp.allclose(out2, ref2, atol=5e-3, rtol=5e-3), "bf16 mismatch vs reference"

    # Case 3: force the K-split accumulator path (tk_max=128 -> 2 K blocks),
    # plus the opt-in bf16-operand MXU flag on f32 inputs.
    B3, H3 = 16, 256
    xc = jax.random.normal(k5, (B3, 1, H3), dtype=jnp.float32)
    yc = jax.random.normal(k6, (1, B3, H3), dtype=jnp.float32)
    ref3 = _reference(xc, yc, temp)
    out3 = jax.block_until_ready(similarity(xc, yc, temp, tk_max=128))
    assert out3.shape == (B3, B3)
    assert jnp.allclose(out3, ref3, atol=1e-4, rtol=1e-4), "K-split mismatch vs reference"
    out3b = jax.block_until_ready(
        similarity(xc, yc, temp, tk_max=128, mxu_dtype=jnp.bfloat16))
    assert jnp.allclose(out3b, ref3, atol=2e-2, rtol=2e-2), "bf16-operand flag mismatch"

    print("KERNEL_OK")
</pallas_src>

<mosaic_0001>
module attributes {stable_mosaic.version = 11 : i64} {
  func.func @_cos_sim_kernel(%arg0: i32, %arg1: i32, %arg2: i32, %arg3: memref<256x128xf32, #tpu.memory_space<vmem>>, %arg4: memref<128x128xf32, #tpu.memory_space<vmem>>, %arg5: memref<256x1xf32, #tpu.memory_space<vmem>>, %arg6: memref<1x128xf32, #tpu.memory_space<vmem>>, %arg7: memref<256x128xf32, #tpu.memory_space<vmem>>, %arg8: memref<256x128xf32, #tpu.memory_space<vmem>>) attributes {dimension_semantics = [#tpu.dimension_semantics<parallel>, #tpu.dimension_semantics<parallel>, #tpu.dimension_semantics<arbitrary>], iteration_bounds = array<i64: 1, 1, 1>, scalar_prefetch = 0 : i64, scratch_operands = 1 : i64, tpu.core_type = #tpu.core_type<tc>, window_params = [{transform_indices = @transform_0, window_bounds = array<i64: 256, 128>}, {transform_indices = @transform_1, window_bounds = array<i64: 128, 128>}, {transform_indices = @transform_2, window_bounds = array<i64: 256, 1>}, {transform_indices = @transform_3, window_bounds = array<i64: 1, 128>}, {transform_indices = @transform_4, window_bounds = array<i64: 256, 128>}]} {
    %c0_i32 = arith.constant 0 : i32
    %0 = arith.cmpi eq, %arg2, %c0_i32 : i32
    %1 = arith.extui %0 : i1 to i32
    %c0_i32_0 = arith.constant 0 : i32
    %2 = arith.cmpi ne, %1, %c0_i32_0 : i32
    scf.if %2 {
      %cst_10 = arith.constant 0.000000e+00 : f32
      %12 = vector.broadcast %cst_10 : f32 to vector<256x128xf32>
      %c0_11 = arith.constant 0 : index
      %c0_12 = arith.constant 0 : index
      %13 = vector.load %arg8[%c0_11, %c0_12] : memref<256x128xf32, #tpu.memory_space<vmem>>, vector<256x128xf32>
      tpu.vector_store %arg8[%c0_11, %c0_12], %12 {strides = array<i32>} : memref<256x128xf32, #tpu.memory_space<vmem>>, vector<256x128xf32>,
    } else {
    }
    %c0 = arith.constant 0 : index
    %c0_1 = arith.constant 0 : index
    %3 = vector.load %arg3[%c0, %c0_1] : memref<256x128xf32, #tpu.memory_space<vmem>>, vector<256x128xf32>
    %c0_2 = arith.constant 0 : index
    %c0_3 = arith.constant 0 : index
    %4 = vector.load %arg4[%c0_2, %c0_3] : memref<128x128xf32, #tpu.memory_space<vmem>>, vector<128x128xf32>
    %c0_4 = arith.constant 0 : index
    %c0_5 = arith.constant 0 : index
    %5 = vector.load %arg8[%c0_4, %c0_5] : memref<256x128xf32, #tpu.memory_space<vmem>>, vector<256x128xf32>
    %cst = arith.constant dense<0.000000e+00> : vector<256x128xf32>
    %6 = tpu.matmul %3, %4, %cst {dimension_numbers = #tpu.dot_dimension_numbers<[1], [1], [0], [0], [0, 0, 1, 0], [], []>} : vector<256x128xf32>, vector<128x128xf32>, vector<256x128xf32> -> vector<256x128xf32>
    %7 = arith.addf %5, %6 : vector<256x128xf32>
    %c0_6 = arith.constant 0 : index
    %c0_7 = arith.constant 0 : index
    %8 = vector.load %arg8[%c0_6, %c0_7] : memref<256x128xf32, #tpu.memory_space<vmem>>, vector<256x128xf32>
    tpu.vector_store %arg8[%c0_6, %c0_7], %7 {strides = array<i32>} : memref<256x128xf32, #tpu.memory_space<vmem>>, vector<256x128xf32>,
    %c0_i32_8 = arith.constant 0 : i32
    %9 = arith.cmpi eq, %arg2, %c0_i32_8 : i32
    %10 = arith.extui %9 : i1 to i32
    %c0_i32_9 = arith.constant 0 : i32
    %11 = arith.cmpi ne, %10, %c0_i32_9 : i32
    scf.if %11 {
      %c0_10 = arith.constant 0 : index
      %c0_11 = arith.constant 0 : index
      %12 = vector.load %arg5[%c0_10, %c0_11] : memref<256x1xf32, #tpu.memory_space<vmem>>, vector<256x1xf32>
      %c0_12 = arith.constant 0 : index
      %c0_13 = arith.constant 0 : index
      %13 = vector.load %arg6[%c0_12, %c0_13] : memref<1x128xf32, #tpu.memory_space<vmem>>, vector<1x128xf32>
      %14 = vector.broadcast %12 : vector<256x1xf32> to vector<256x128xf32>
      %15 = vector.broadcast %13 : vector<1x128xf32> to vector<256x128xf32>
      %16 = arith.mulf %14, %15 : vector<256x128xf32>
      %cst_14 = arith.constant 9.99999993E-9 : f32
      %17 = vector.broadcast %cst_14 : f32 to vector<256x128xf32>
      %18 = arith.maximumf %16, %17 : vector<256x128xf32>
      %c0_15 = arith.constant 0 : index
      %c0_16 = arith.constant 0 : index
      %19 = vector.load %arg8[%c0_15, %c0_16] : memref<256x128xf32, #tpu.memory_space<vmem>>, vector<256x128xf32>
      %20 = arith.divf %19, %18 : vector<256x128xf32>
      %cst_17 = arith.constant 2.000000e+01 : f32
      %21 = vector.broadcast %cst_17 : f32 to vector<256x128xf32>
      %22 = arith.mulf %20, %21 : vector<256x128xf32>
      %c0_18 = arith.constant 0 : index
      %c0_19 = arith.constant 0 : index
      %23 = vector.load %arg7[%c0_18, %c0_19] : memref<256x128xf32, #tpu.memory_space<vmem>>, vector<256x128xf32>
      tpu.vector_store %arg7[%c0_18, %c0_19], %22 {strides = array<i32>} : memref<256x128xf32, #tpu.memory_space<vmem>>, vector<256x128xf32>,
    } else {
    }
    return
  }
  func.func @transform_0(%arg0: i32, %arg1: i32, %arg2: i32) -> (i32, i32) {
    %c0_i32 = arith.constant 0 : i32
    return %arg0, %arg2 : i32, i32
  }
  func.func @transform_1(%arg0: i32, %arg1: i32, %arg2: i32) -> (i32, i32) {
    %c0_i32 = arith.constant 0 : i32
    return %arg1, %arg2 : i32, i32
  }
  func.func @transform_2(%arg0: i32, %arg1: i32, %arg2: i32) -> (i32, i32) {
    %c0_i32 = arith.constant 0 : i32
    %c0_i32_0 = arith.constant 0 : i32
    return %arg0, %c0_i32 : i32, i32
  }
  func.func @transform_3(%arg0: i32, %arg1: i32, %arg2: i32) -> (i32, i32) {
    %c0_i32 = arith.constant 0 : i32
    %c0_i32_0 = arith.constant 0 : i32
    return %c0_i32, %arg1 : i32, i32
  }
  func.func @transform_4(%arg0: i32, %arg1: i32, %arg2: i32) -> (i32, i32) {
    %c0_i32 = arith.constant 0 : i32
    return %arg0, %arg1 : i32, i32
  }
}

</mosaic_0001>

<llo_original>
// kernel: tpu_custom_call.1
$region0: #{tpu_custom_call.1}
  #allocation0 [shape = 'u32[]', space=smem, size = 0x4, offset = 0x4, fixed_abs, tag = 'smem constant byte address 0x4 - core index']
  #allocation1 [shape = 'u32[144,128]{1,0:T(1,128)}', space=vmem, size = 0x12000, scoped, tag = 'internal scratch']
  #allocation2 [shape = 'f32[256,128]{1,0:T(8,128)}', space=vmem, size = 0x20000, scoped, tag = 'scratch operand']
  %s0 = inlined_call_operand.vmem [shape: f32[256,128], index: 0, kind: input, shape index: {}]
  %s1 = inlined_call_operand.hbm [shape: f32[128,128], index: 1, kind: input, shape index: {}]
  %s2 = inlined_call_operand.vmem [shape: f32[256,1], index: 2, kind: input, shape index: {}]
  %s3 = inlined_call_operand.vmem [shape: f32[1,128], index: 3, kind: input, shape index: {}]
  %s4 = inlined_call_operand.hbm [shape: f32[256,128], index: 4, kind: output, shape index: {}]
  %s5 = sld [smem:[#allocation0]]
  $region38: #{tpu_custom_call.1} parent=0
    _
  %s7 = ssub.s32 1, %s5
  %s8 = scalar_select 0, %s7, %s5
  $region1: #{tpu_custom_call.1} parent=0
    #allocation3 [shape = 'u8[65536]{0}', space=vmem, size = 0x10000, scoped, tag = 'input window, operand 1, single buffered']
    #allocation4 [shape = 's32[1]{0}', space=sflag, size = 0x4, scoped, tag = 'scoped memory for tpu_custom_call.1']
    #allocation5 [shape = 's32[1]{0}', space=sflag, size = 0x4, scoped, tag = 'scoped memory for tpu_custom_call.1']
    #allocation6 [shape = 'u8[131072]{0}', space=vmem, size = 0x20000, scoped, tag = 'output window, operand 0, single buffered']
    %9 = vsyncpa [#allocation4], 0
    %10 = vsyncpa [#allocation5], 0
    // Predicated region
    $region2: #{tpu_custom_call.1} parent=1 // pred_check
      _
    $region3: #{tpu_custom_call.1} parent=1 // pred_check_branch
      %12 = sbr.rel (0) target = $region5
    $region4: #{tpu_custom_call.1} parent=1 // pred_region
      _
    $region5: #{tpu_custom_call.1} parent=1 // pred_fallthru
      _
    // Predicated region
    $region6: #{tpu_custom_call.1} parent=1 // pred_check
      _
    $region7: #{tpu_custom_call.1} parent=1 // pred_check_branch
      %14 = sbr.rel (0) target = $region9
    $region8: #{tpu_custom_call.1} parent=1 // pred_region
      %s16 = ssub.s32 2048, 2048
      %17 = vsyncadd [#allocation4], %s16
      %s18 = sshll.u32 [#allocation3], 4
      %s19 = int_to_ptr.vmem [resolvable:$true] %s18
      %24 = dma.hbm_to_vmem [thread:$0]  %s1, 2048, %s19, [#allocation4], 128, 128, 8
    $region9: #{tpu_custom_call.1} parent=1 // pred_fallthru
      _
    // Predicated region
    $region10: #{tpu_custom_call.1} parent=1 // pred_check
      _
    $region11: #{tpu_custom_call.1} parent=1 // pred_check_branch
      %26 = sbr.rel (0) target = $region13
    $region12: #{tpu_custom_call.1} parent=1 // pred_region
      _
    $region13: #{tpu_custom_call.1} parent=1 // pred_fallthru
      _
    // Predicated region
    $region14: #{tpu_custom_call.1} parent=1 // pred_check
      _
    $region15: #{tpu_custom_call.1} parent=1 // pred_check_branch
      %28 = sbr.rel (0) target = $region17
    $region16: #{tpu_custom_call.1} parent=1 // pred_region
      _
    $region17: #{tpu_custom_call.1} parent=1 // pred_fallthru
      _
    // Predicated region
    $region18: #{tpu_custom_call.1} parent=1 // pred_check
      _
    $region19: #{tpu_custom_call.1} parent=1 // pred_check_branch
      %30 = sbr.rel (0) target = $region21
    $region20: #{tpu_custom_call.1} parent=1 // pred_region
      %31 = dma.done [#allocation4], 2048
    $region21: #{tpu_custom_call.1} parent=1 // pred_fallthru
      _
    %p32 = scmp.eq.s32.totalorder 0, 0
    // Predicated region
    $region22: #{tpu_custom_call.1} parent=1 // pred_check
      %p33 = pneg %p32
    $region23: #{tpu_custom_call.1} parent=1 // pred_check_branch
      %35 = sbr.rel (%p33) target = $region25
    $region24: #{tpu_custom_call.1} parent=1 // pred_region
      %36 = vst [vmem:[#allocation2] sm:$0xff] 0.0
      %37 = vst [vmem:[#allocation2 + $0x8] sm:$0xff] 0.0
      %38 = vst [vmem:[#allocation2 + $0x10] sm:$0xff] 0.0
      %39 = vst [vmem:[#allocation2 + $0x18] sm:$0xff] 0.0
      %40 = vst [vmem:[#allocation2 + $0x20] sm:$0xff] 0.0
      %41 = vst [vmem:[#allocation2 + $0x28] sm:$0xff] 0.0
      %42 = vst [vmem:[#allocation2 + $0x30] sm:$0xff] 0.0
      %43 = vst [vmem:[#allocation2 + $0x38] sm:$0xff] 0.0
      %44 = vst [vmem:[#allocation2 + $0x40] sm:$0xff] 0.0
      %45 = vst [vmem:[#allocation2 + $0x48] sm:$0xff] 0.0
      %46 = vst [vmem:[#allocation2 + $0x50] sm:$0xff] 0.0
      %47 = vst [vmem:[#allocation2 + $0x58] sm:$0xff] 0.0
      %48 = vst [vmem:[#allocation2 + $0x60] sm:$0xff] 0.0
      %49 = vst [vmem:[#allocation2 + $0x68] sm:$0xff] 0.0
      %50 = vst [vmem:[#allocation2 + $0x70] sm:$0xff] 0.0
      %51 = vst [vmem:[#allocation2 + $0x78] sm:$0xff] 0.0
      %52 = vst [vmem:[#allocation2 + $0x80] sm:$0xff] 0.0
      %53 = vst [vmem:[#allocation2 + $0x88] sm:$0xff] 0.0
      %54 = vst [vmem:[#allocation2 + $0x90] sm:$0xff] 0.0
      %55 = vst [vmem:[#allocation2 + $0x98] sm:$0xff] 0.0
      %56 = vst [vmem:[#allocation2 + $0xa0] sm:$0xff] 0.0
      %57 = vst [vmem:[#allocation2 + $0xa8] sm:$0xff] 0.0
      %58 = vst [vmem:[#allocation2 + $0xb0] sm:$0xff] 0.0
      %59 = vst [vmem:[#allocation2 + $0xb8] sm:$0xff] 0.0
      %60 = vst [vmem:[#allocation2 + $0xc0] sm:$0xff] 0.0
      %61 = vst [vmem:[#allocation2 + $0xc8] sm:$0xff] 0.0
      %62 = vst [vmem:[#allocation2 + $0xd0] sm:$0xff] 0.0
      %63 = vst [vmem:[#allocation2 + $0xd8] sm:$0xff] 0.0
      %64 = vst [vmem:[#allocation2 + $0xe0] sm:$0xff] 0.0
      %65 = vst [vmem:[#allocation2 + $0xe8] sm:$0xff] 0.0
      %66 = vst [vmem:[#allocation2 + $0xf0] sm:$0xff] 0.0
      %67 = vst [vmem:[#allocation2 + $0xf8] sm:$0xff] 0.0
    $region25: #{tpu_custom_call.1} parent=1 // pred_fallthru
      _
    %v68 = vld [vmem:[%s0] sm:$0xff]
    %v69 = vld [vmem:[%s0 + $0x8] sm:$0xff]
    %v70 = vld [vmem:[%s0 + $0x10] sm:$0xff]
    %v71 = vld [vmem:[%s0 + $0x18] sm:$0xff]
    %v72 = vld [vmem:[%s0 + $0x20] sm:$0xff]
    %v73 = vld [vmem:[%s0 + $0x28] sm:$0xff]
    %v74 = vld [vmem:[%s0 + $0x30] sm:$0xff]
    %v75 = vld [vmem:[%s0 + $0x38] sm:$0xff]
    %v76 = vld [vmem:[%s0 + $0x40] sm:$0xff]
    %v77 = vld [vmem:[%s0 + $0x48] sm:$0xff]
    %v78 = vld [vmem:[%s0 + $0x50] sm:$0xff]
    %v79 = vld [vmem:[%s0 + $0x58] sm:$0xff]
    %v80 = vld [vmem:[%s0 + $0x60] sm:$0xff]
    %v81 = vld [vmem:[%s0 + $0x68] sm:$0xff]
    %v82 = vld [vmem:[%s0 + $0x70] sm:$0xff]
    %v83 = vld [vmem:[%s0 + $0x78] sm:$0xff]
    %v84 = vld [vmem:[%s0 + $0x80] sm:$0xff]
    %v85 = vld [vmem:[%s0 + $0x88] sm:$0xff]
    %v86 = vld [vmem:[%s0 + $0x90] sm:$0xff]
    %v87 = vld [vmem:[%s0 + $0x98] sm:$0xff]
    %v88 = vld [vmem:[%s0 + $0xa0] sm:$0xff]
    %v89 = vld [vmem:[%s0 + $0xa8] sm:$0xff]
    %v90 = vld [vmem:[%s0 + $0xb0] sm:$0xff]
    %v91 = vld [vmem:[%s0 + $0xb8] sm:$0xff]
    %v92 = vld [vmem:[%s0 + $0xc0] sm:$0xff]
    %v93 = vld [vmem:[%s0 + $0xc8] sm:$0xff]
    %v94 = vld [vmem:[%s0 + $0xd0] sm:$0xff]
    %v95 = vld [vmem:[%s0 + $0xd8] sm:$0xff]
    %v96 = vld [vmem:[%s0 + $0xe0] sm:$0xff]
    %v97 = vld [vmem:[%s0 + $0xe8] sm:$0xff]
    %v98 = vld [vmem:[%s0 + $0xf0] sm:$0xff]
    %v99 = vld [vmem:[%s0 + $0xf8] sm:$0xff]
    %v100 = vld [vmem:[#allocation3] sm:$0xff]
    %v101 = vld [vmem:[#allocation3 + $0x8] sm:$0xff]
    %v102 = vld [vmem:[#allocation3 + $0x10] sm:$0xff]
    %v103 = vld [vmem:[#allocation3 + $0x18] sm:$0xff]
    %v104 = vld [vmem:[#allocation3 + $0x20] sm:$0xff]
    %v105 = vld [vmem:[#allocation3 + $0x28] sm:$0xff]
    %v106 = vld [vmem:[#allocation3 + $0x30] sm:$0xff]
    %v107 = vld [vmem:[#allocation3 + $0x38] sm:$0xff]
    %v108 = vld [vmem:[#allocation3 + $0x40] sm:$0xff]
    %v109 = vld [vmem:[#allocation3 + $0x48] sm:$0xff]
    %v110 = vld [vmem:[#allocation3 + $0x50] sm:$0xff]
    %v111 = vld [vmem:[#allocation3 + $0x58] sm:$0xff]
    %v112 = vld [vmem:[#allocation3 + $0x60] sm:$0xff]
    %v113 = vld [vmem:[#allocation3 + $0x68] sm:$0xff]
    %v114 = vld [vmem:[#allocation3 + $0x70] sm:$0xff]
    %v115 = vld [vmem:[#allocation3 + $0x78] sm:$0xff]
    %v116 = vld [vmem:[#allocation2] sm:$0xff]
    %v117 = vld [vmem:[#allocation2 + $0x8] sm:$0xff]
    %v118 = vld [vmem:[#allocation2 + $0x10] sm:$0xff]
    %v119 = vld [vmem:[#allocation2 + $0x18] sm:$0xff]
    %v120 = vld [vmem:[#allocation2 + $0x20] sm:$0xff]
    %v121 = vld [vmem:[#allocation2 + $0x28] sm:$0xff]
    %v122 = vld [vmem:[#allocation2 + $0x30] sm:$0xff]
    %v123 = vld [vmem:[#allocation2 + $0x38] sm:$0xff]
    %v124 = vld [vmem:[#allocation2 + $0x40] sm:$0xff]
    %v125 = vld [vmem:[#allocation2 + $0x48] sm:$0xff]
    %v126 = vld [vmem:[#allocation2 + $0x50] sm:$0xff]
    %v127 = vld [vmem:[#allocation2 + $0x58] sm:$0xff]
    %v128 = vld [vmem:[#allocation2 + $0x60] sm:$0xff]
    %v129 = vld [vmem:[#allocation2 + $0x68] sm:$0xff]
    %v130 = vld [vmem:[#allocation2 + $0x70] sm:$0xff]
    %v131 = vld [vmem:[#allocation2 + $0x78] sm:$0xff]
    %v132 = vld [vmem:[#allocation2 + $0x80] sm:$0xff]
    %v133 = vld [vmem:[#allocation2 + $0x88] sm:$0xff]
    %v134 = vld [vmem:[#allocation2 + $0x90] sm:$0xff]
    %v135 = vld [vmem:[#allocation2 + $0x98] sm:$0xff]
    %v136 = vld [vmem:[#allocation2 + $0xa0] sm:$0xff]
    %v137 = vld [vmem:[#allocation2 + $0xa8] sm:$0xff]
    %v138 = vld [vmem:[#allocation2 + $0xb0] sm:$0xff]
    %v139 = vld [vmem:[#allocation2 + $0xb8] sm:$0xff]
    %v140 = vld [vmem:[#allocation2 + $0xc0] sm:$0xff]
    %v141 = vld [vmem:[#allocation2 + $0xc8] sm:$0xff]
    %v142 = vld [vmem:[#allocation2 + $0xd0] sm:$0xff]
    %v143 = vld [vmem:[#allocation2 + $0xd8] sm:$0xff]
    %v144 = vld [vmem:[#allocation2 + $0xe0] sm:$0xff]
    %v145 = vld [vmem:[#allocation2 + $0xe8] sm:$0xff]
    %v146 = vld [vmem:[#allocation2 + $0xf0] sm:$0xff]
    %v147 = vld [vmem:[#allocation2 + $0xf8] sm:$0xff]
    %148 = vmatprep.subr.mxu0 0.0
    %149 = vmatpush1.xpose.msra.mxu0 %v115
    %150 = vmatprep.subr.mxu0 0.0
    %151 = vmatpush1.xpose.msra.mxu0 %v114
    %152 = vmatprep.subr.mxu0 0.0
    %153 = vmatpush1.xpose.msra.mxu0 %v113
    %154 = vmatprep.subr.mxu0 0.0
    %155 = vmatpush1.xpose.msra.mxu0 %v112
    %156 = vmatprep.subr.mxu0 0.0
    %157 = vmatpush1.xpose.msra.mxu0 %v111
    %158 = vmatprep.subr.mxu0 0.0
    %159 = vmatpush1.xpose.msra.mxu0 %v110
    %160 = vmatprep.subr.mxu0 0.0
    %161 = vmatpush1.xpose.msra.mxu0 %v109
    %162 = vmatprep.subr.mxu0 0.0
    %163 = vmatpush1.xpose.msra.mxu0 %v108
    %164 = vmatprep.subr.mxu0 0.0
    %165 = vmatpush1.xpose.msra.mxu0 %v107
    %166 = vmatprep.subr.mxu0 0.0
    %167 = vmatpush1.xpose.msra.mxu0 %v106
    %168 = vmatprep.subr.mxu0 0.0
    %169 = vmatpush1.xpose.msra.mxu0 %v105
    %170 = vmatprep.subr.mxu0 0.0
    %171 = vmatpush1.xpose.msra.mxu0 %v104
    %172 = vmatprep.subr.mxu0 0.0
    %173 = vmatpush1.xpose.msra.mxu0 %v103
    %174 = vmatprep.subr.mxu0 0.0
    %175 = vmatpush1.xpose.msra.mxu0 %v102
    %176 = vmatprep.subr.mxu0 0.0
    %177 = vmatpush1.xpose.msra.mxu0 %v101
    %178 = vmatprep.subr.mxu0 0.0
    %179 = vmatpush1.xpose.msra.mxu0 %v100
    %180 = vmatprep.subr.mxu0 0.0
    %181 = vmatpush2.xpose.msra.mxu0 0.0
    %182 = vmatprep.subr.mxu0 0.0
    %183 = vmatpush2.xpose.msra.mxu0 0.0
    %184 = vmatprep.subr.mxu0 0.0
    %185 = vmatpush2.xpose.msra.mxu0 0.0
    %186 = vmatprep.subr.mxu0 0.0
    %187 = vmatpush2.xpose.msra.mxu0 0.0
    %188 = vmatprep.subr.mxu0 0.0
    %189 = vmatpush2.xpose.msra.mxu0 0.0
    %190 = vmatprep.subr.mxu0 0.0
    %191 = vmatpush2.xpose.msra.mxu0 0.0
    %192 = vmatprep.subr.mxu0 0.0
    %193 = vmatpush2.xpose.msra.mxu0 0.0
    %194 = vmatprep.subr.mxu0 0.0
    %195 = vmatpush2.xpose.msra.mxu0 0.0
    %196 = vmatprep.subr.mxu0 0.0
    %197 = vmatpush2.xpose.msra.mxu0 0.0
    %198 = vmatprep.subr.mxu0 0.0
    %199 = vmatpush2.xpose.msra.mxu0 0.0
    %200 = vmatprep.subr.mxu0 0.0
    %201 = vmatpush2.xpose.msra.mxu0 0.0
    %202 = vmatprep.subr.mxu0 0.0
    %203 = vmatpush2.xpose.msra.mxu0 0.0
    %204 = vmatprep.subr.mxu0 0.0
    %205 = vmatpush2.xpose.msra.mxu0 0.0
    %206 = vmatprep.subr.mxu0 0.0
    %207 = vmatpush2.xpose.msra.mxu0 0.0
    %208 = vmatprep.subr.mxu0 0.0
    %209 = vmatpush2.xpose.msra.mxu0 0.0
    %210 = vmatprep.subr.mxu0 0.0
    %211 = vmatpush2.xpose.msra.mxu0 0.0
    %212 = vmatprep.mubr.f32.mxu0 0.0
    %213 = vmatmul.mubr.f32.gmra.mxu0 %v68
    %v214 = vpop.f32.mrf.mxu0
    %v215 = vadd.f32 0.0, %v214
    %v216 = vpop.f32.mrf.mxu0
    %217 = vmatprep.mubr.f32.mxu0 0.0
    %218 = vmatmul.mubr.f32.gmra.mxu0 %v69
    %v219 = vpop.f32.mrf.mxu0
    %v220 = vadd.f32 0.0, %v219
    %v221 = vpop.f32.mrf.mxu0
    %222 = vmatprep.mubr.f32.mxu0 0.0
    %223 = vmatmul.mubr.f32.gmra.mxu0 %v70
    %v224 = vpop.f32.mrf.mxu0
    %v225 = vadd.f32 0.0, %v224
    %v226 = vpop.f32.mrf.mxu0
    %227 = vmatprep.mubr.f32.mxu0 0.0
    %228 = vmatmul.mubr.f32.gmra.mxu0 %v71
    %v229 = vpop.f32.mrf.mxu0
    %v230 = vadd.f32 0.0, %v229
    %v231 = vpop.f32.mrf.mxu0
    %232 = vmatprep.mubr.f32.mxu0 0.0
    %233 = vmatmul.mubr.f32.gmra.mxu0 %v72
    %v234 = vpop.f32.mrf.mxu0
    %v235 = vadd.f32 0.0, %v234
    %v236 = vpop.f32.mrf.mxu0
    %237 = vmatprep.mubr.f32.mxu0 0.0
    %238 = vmatmul.mubr.f32.gmra.mxu0 %v73
    %v239 = vpop.f32.mrf.mxu0
    %v240 = vadd.f32 0.0, %v239
    %v241 = vpop.f32.mrf.mxu0
    %242 = vmatprep.mubr.f32.mxu0 0.0
    %243 = vmatmul.mubr.f32.gmra.mxu0 %v74
    %v244 = vpop.f32.mrf.mxu0
    %v245 = vadd.f32 0.0, %v244
    %v246 = vpop.f32.mrf.mxu0
    %247 = vmatprep.mubr.f32.mxu0 0.0
    %248 = vmatmul.mubr.f32.gmra.mxu0 %v75
    %v249 = vpop.f32.mrf.mxu0
    %v250 = vadd.f32 0.0, %v249
    %v251 = vpop.f32.mrf.mxu0
    %252 = vmatprep.mubr.f32.mxu0 0.0
    %253 = vmatmul.mubr.f32.gmra.mxu0 %v76
    %v254 = vpop.f32.mrf.mxu0
    %v255 = vadd.f32 0.0, %v254
    %v256 = vpop.f32.mrf.mxu0
    %257 = vmatprep.mubr.f32.mxu0 0.0
    %258 = vmatmul.mubr.f32.gmra.mxu0 %v77
    %v259 = vpop.f32.mrf.mxu0
    %v260 = vadd.f32 0.0, %v259
    %v261 = vpop.f32.mrf.mxu0
    %262 = vmatprep.mubr.f32.mxu0 0.0
    %263 = vmatmul.mubr.f32.gmra.mxu0 %v78
    %v264 = vpop.f32.mrf.mxu0
    %v265 = vadd.f32 0.0, %v264
    %v266 = vpop.f32.mrf.mxu0
    %267 = vmatprep.mubr.f32.mxu0 0.0
    %268 = vmatmul.mubr.f32.gmra.mxu0 %v79
    %v269 = vpop.f32.mrf.mxu0
    %v270 = vadd.f32 0.0, %v269
    %v271 = vpop.f32.mrf.mxu0
    %272 = vmatprep.mubr.f32.mxu0 0.0
    %273 = vmatmul.mubr.f32.gmra.mxu0 %v80
    %v274 = vpop.f32.mrf.mxu0
    %v275 = vadd.f32 0.0, %v274
    %v276 = vpop.f32.mrf.mxu0
    %277 = vmatprep.mubr.f32.mxu0 0.0
    %278 = vmatmul.mubr.f32.gmra.mxu0 %v81
    %v279 = vpop.f32.mrf.mxu0
    %v280 = vadd.f32 0.0, %v279
    %v281 = vpop.f32.mrf.mxu0
    %282 = vmatprep.mubr.f32.mxu0 0.0
    %283 = vmatmul.mubr.f32.gmra.mxu0 %v82
    %v284 = vpop.f32.mrf.mxu0
    %v285 = vadd.f32 0.0, %v284
    %v286 = vpop.f32.mrf.mxu0
    %287 = vmatprep.mubr.f32.mxu0 0.0
    %288 = vmatmul.mubr.f32.gmra.mxu0 %v83
    %v289 = vpop.f32.mrf.mxu0
    %v290 = vadd.f32 0.0, %v289
    %v291 = vpop.f32.mrf.mxu0
    %292 = vmatprep.mubr.f32.mxu0 0.0
    %293 = vmatmul.mubr.f32.gmra.mxu0 %v84
    %v294 = vpop.f32.mrf.mxu0
    %v295 = vadd.f32 0.0, %v294
    %v296 = vpop.f32.mrf.mxu0
    %297 = vmatprep.mubr.f32.mxu0 0.0
    %298 = vmatmul.mubr.f32.gmra.mxu0 %v85
    %v299 = vpop.f32.mrf.mxu0
    %v300 = vadd.f32 0.0, %v299
    %v301 = vpop.f32.mrf.mxu0
    %302 = vmatprep.mubr.f32.mxu0 0.0
    %303 = vmatmul.mubr.f32.gmra.mxu0 %v86
    %v304 = vpop.f32.mrf.mxu0
    %v305 = vadd.f32 0.0, %v304
    %v306 = vpop.f32.mrf.mxu0
    %307 = vmatprep.mubr.f32.mxu0 0.0
    %308 = vmatmul.mubr.f32.gmra.mxu0 %v87
    %v309 = vpop.f32.mrf.mxu0
    %v310 = vadd.f32 0.0, %v309
    %v311 = vpop.f32.mrf.mxu0
    %312 = vmatprep.mubr.f32.mxu0 0.0
    %313 = vmatmul.mubr.f32.gmra.mxu0 %v88
    %v314 = vpop.f32.mrf.mxu0
    %v315 = vadd.f32 0.0, %v314
    %v316 = vpop.f32.mrf.mxu0
    %317 = vmatprep.mubr.f32.mxu0 0.0
    %318 = vmatmul.mubr.f32.gmra.mxu0 %v89
    %v319 = vpop.f32.mrf.mxu0
    %v320 = vadd.f32 0.0, %v319
    %v321 = vpop.f32.mrf.mxu0
    %322 = vmatprep.mubr.f32.mxu0 0.0
    %323 = vmatmul.mubr.f32.gmra.mxu0 %v90
    %v324 = vpop.f32.mrf.mxu0
    %v325 = vadd.f32 0.0, %v324
    %v326 = vpop.f32.mrf.mxu0
    %327 = vmatprep.mubr.f32.mxu0 0.0
    %328 = vmatmul.mubr.f32.gmra.mxu0 %v91
    %v329 = vpop.f32.mrf.mxu0
    %v330 = vadd.f32 0.0, %v329
    %v331 = vpop.f32.mrf.mxu0
    %332 = vmatprep.mubr.f32.mxu0 0.0
    %333 = vmatmul.mubr.f32.gmra.mxu0 %v92
    %v334 = vpop.f32.mrf.mxu0
    %v335 = vadd.f32 0.0, %v334
    %v336 = vpop.f32.mrf.mxu0
    %337 = vmatprep.mubr.f32.mxu0 0.0
    %338 = vmatmul.mubr.f32.gmra.mxu0 %v93
    %v339 = vpop.f32.mrf.mxu0
    %v340 = vadd.f32 0.0, %v339
    %v341 = vpop.f32.mrf.mxu0
    %342 = vmatprep.mubr.f32.mxu0 0.0
    %343 = vmatmul.mubr.f32.gmra.mxu0 %v94
    %v344 = vpop.f32.mrf.mxu0
    %v345 = vadd.f32 0.0, %v344
    %v346 = vpop.f32.mrf.mxu0
    %347 = vmatprep.mubr.f32.mxu0 0.0
    %348 = vmatmul.mubr.f32.gmra.mxu0 %v95
    %v349 = vpop.f32.mrf.mxu0
    %v350 = vadd.f32 0.0, %v349
    %v351 = vpop.f32.mrf.mxu0
    %352 = vmatprep.mubr.f32.mxu0 0.0
    %353 = vmatmul.mubr.f32.gmra.mxu0 %v96
    %v354 = vpop.f32.mrf.mxu0
    %v355 = vadd.f32 0.0, %v354
    %v356 = vpop.f32.mrf.mxu0
    %357 = vmatprep.mubr.f32.mxu0 0.0
    %358 = vmatmul.mubr.f32.gmra.mxu0 %v97
    %v359 = vpop.f32.mrf.mxu0
    %v360 = vadd.f32 0.0, %v359
    %v361 = vpop.f32.mrf.mxu0
    %362 = vmatprep.mubr.f32.mxu0 0.0
    %363 = vmatmul.mubr.f32.gmra.mxu0 %v98
    %v364 = vpop.f32.mrf.mxu0
    %v365 = vadd.f32 0.0, %v364
    %v366 = vpop.f32.mrf.mxu0
    %367 = vmatprep.mubr.f32.mxu0 0.0
    %368 = vmatmul.mubr.f32.gmra.mxu0 %v99
    %v369 = vpop.f32.mrf.mxu0
    %v370 = vadd.f32 0.0, %v369
    %v371 = vpop.f32.mrf.mxu0
    %372 = vdwg.mxu0
    %v373 = vadd.f32 %v116, %v215
    %v374 = vadd.f32 %v117, %v220
    %v375 = vadd.f32 %v118, %v225
    %v376 = vadd.f32 %v119, %v230
    %v377 = vadd.f32 %v120, %v235
    %v378 = vadd.f32 %v121, %v240
    %v379 = vadd.f32 %v122, %v245
    %v380 = vadd.f32 %v123, %v250
    %v381 = vadd.f32 %v124, %v255
    %v382 = vadd.f32 %v125, %v260
    %v383 = vadd.f32 %v126, %v265
    %v384 = vadd.f32 %v127, %v270
    %v385 = vadd.f32 %v128, %v275
    %v386 = vadd.f32 %v129, %v280
    %v387 = vadd.f32 %v130, %v285
    %v388 = vadd.f32 %v131, %v290
    %v389 = vadd.f32 %v132, %v295
    %v390 = vadd.f32 %v133, %v300
    %v391 = vadd.f32 %v134, %v305
    %v392 = vadd.f32 %v135, %v310
    %v393 = vadd.f32 %v136, %v315
    %v394 = vadd.f32 %v137, %v320
    %v395 = vadd.f32 %v138, %v325
    %v396 = vadd.f32 %v139, %v330
    %v397 = vadd.f32 %v140, %v335
    %v398 = vadd.f32 %v141, %v340
    %v399 = vadd.f32 %v142, %v345
    %v400 = vadd.f32 %v143, %v350
    %v401 = vadd.f32 %v144, %v355
    %v402 = vadd.f32 %v145, %v360
    %v403 = vadd.f32 %v146, %v365
    %v404 = vadd.f32 %v147, %v370
    %405 = vst [vmem:[#allocation2] sm:$0xff] %v373
    %406 = vst [vmem:[#allocation2 + $0x8] sm:$0xff] %v374
    %407 = vst [vmem:[#allocation2 + $0x10] sm:$0xff] %v375
    %408 = vst [vmem:[#allocation2 + $0x18] sm:$0xff] %v376
    %409 = vst [vmem:[#allocation2 + $0x20] sm:$0xff] %v377
    %410 = vst [vmem:[#allocation2 + $0x28] sm:$0xff] %v378
    %411 = vst [vmem:[#allocation2 + $0x30] sm:$0xff] %v379
    %412 = vst [vmem:[#allocation2 + $0x38] sm:$0xff] %v380
    %413 = vst [vmem:[#allocation2 + $0x40] sm:$0xff] %v381
    %414 = vst [vmem:[#allocation2 + $0x48] sm:$0xff] %v382
    %415 = vst [vmem:[#allocation2 + $0x50] sm:$0xff] %v383
    %416 = vst [vmem:[#allocation2 + $0x58] sm:$0xff] %v384
    %417 = vst [vmem:[#allocation2 + $0x60] sm:$0xff] %v385
    %418 = vst [vmem:[#allocation2 + $0x68] sm:$0xff] %v386
    %419 = vst [vmem:[#allocation2 + $0x70] sm:$0xff] %v387
    %420 = vst [vmem:[#allocation2 + $0x78] sm:$0xff] %v388
    %421 = vst [vmem:[#allocation2 + $0x80] sm:$0xff] %v389
    %422 = vst [vmem:[#allocation2 + $0x88] sm:$0xff] %v390
    %423 = vst [vmem:[#allocation2 + $0x90] sm:$0xff] %v391
    %424 = vst [vmem:[#allocation2 + $0x98] sm:$0xff] %v392
    %425 = vst [vmem:[#allocation2 + $0xa0] sm:$0xff] %v393
    %426 = vst [vmem:[#allocation2 + $0xa8] sm:$0xff] %v394
    %427 = vst [vmem:[#allocation2 + $0xb0] sm:$0xff] %v395
    %428 = vst [vmem:[#allocation2 + $0xb8] sm:$0xff] %v396
    %429 = vst [vmem:[#allocation2 + $0xc0] sm:$0xff] %v397
    %430 = vst [vmem:[#allocation2 + $0xc8] sm:$0xff] %v398
    %431 = vst [vmem:[#allocation2 + $0xd0] sm:$0xff] %v399
    %432 = vst [vmem:[#allocation2 + $0xd8] sm:$0xff] %v400
    %433 = vst [vmem:[#allocation2 + $0xe0] sm:$0xff] %v401
    %434 = vst [vmem:[#allocation2 + $0xe8] sm:$0xff] %v402
    %435 = vst [vmem:[#allocation2 + $0xf0] sm:$0xff] %v403
    %436 = vst [vmem:[#allocation2 + $0xf8] sm:$0xff] %v404
    // Predicated region
    $region26: #{tpu_custom_call.1} parent=1 // pred_check
      %p437 = pneg %p32
    $region27: #{tpu_custom_call.1} parent=1 // pred_check_branch
      %439 = sbr.rel (%p437) target = $region29
    $region28: #{tpu_custom_call.1} parent=1 // pred_region
      %v440 = vld [vmem:[%s2] sm:$0xff]
      %v441 = vld [vmem:[%s2 + $0x8] sm:$0xff]
      %v442 = vld [vmem:[%s2 + $0x10] sm:$0xff]
      %v443 = vld [vmem:[%s2 + $0x18] sm:$0xff]
      %v444 = vld [vmem:[%s2 + $0x20] sm:$0xff]
      %v445 = vld [vmem:[%s2 + $0x28] sm:$0xff]
      %v446 = vld [vmem:[%s2 + $0x30] sm:$0xff]
      %v447 = vld [vmem:[%s2 + $0x38] sm:$0xff]
      %v448 = vld [vmem:[%s2 + $0x40] sm:$0xff]
      %v449 = vld [vmem:[%s2 + $0x48] sm:$0xff]
      %v450 = vld [vmem:[%s2 + $0x50] sm:$0xff]
      %v451 = vld [vmem:[%s2 + $0x58] sm:$0xff]
      %v452 = vld [vmem:[%s2 + $0x60] sm:$0xff]
      %v453 = vld [vmem:[%s2 + $0x68] sm:$0xff]
      %v454 = vld [vmem:[%s2 + $0x70] sm:$0xff]
      %v455 = vld [vmem:[%s2 + $0x78] sm:$0xff]
      %v456 = vld [vmem:[%s2 + $0x80] sm:$0xff]
      %v457 = vld [vmem:[%s2 + $0x88] sm:$0xff]
      %v458 = vld [vmem:[%s2 + $0x90] sm:$0xff]
      %v459 = vld [vmem:[%s2 + $0x98] sm:$0xff]
      %v460 = vld [vmem:[%s2 + $0xa0] sm:$0xff]
      %v461 = vld [vmem:[%s2 + $0xa8] sm:$0xff]
      %v462 = vld [vmem:[%s2 + $0xb0] sm:$0xff]
      %v463 = vld [vmem:[%s2 + $0xb8] sm:$0xff]
      %v464 = vld [vmem:[%s2 + $0xc0] sm:$0xff]
      %v465 = vld [vmem:[%s2 + $0xc8] sm:$0xff]
      %v466 = vld [vmem:[%s2 + $0xd0] sm:$0xff]
      %v467 = vld [vmem:[%s2 + $0xd8] sm:$0xff]
      %v468 = vld [vmem:[%s2 + $0xe0] sm:$0xff]
      %v469 = vld [vmem:[%s2 + $0xe8] sm:$0xff]
      %v470 = vld [vmem:[%s2 + $0xf0] sm:$0xff]
      %v471 = vld [vmem:[%s2 + $0xf8] sm:$0xff]
      %v472 = vld [vmem:[%s3] sm:$0x1]
      %474 = vset.pattern.permute.xlu0 0
      %475 = vperm.xlu0 %474, %v440
      %v476 = vpop.permute.xlu0 %475
      %479 = vset.pattern.permute.xlu0 0
      %480 = vperm.xlu0 %479, %v441
      %v481 = vpop.permute.xlu0 %480
      %484 = vset.pattern.permute.xlu0 0
      %485 = vperm.xlu0 %484, %v442
      %v486 = vpop.permute.xlu0 %485
      %489 = vset.pattern.permute.xlu0 0
      %490 = vperm.xlu0 %489, %v443
      %v491 = vpop.permute.xlu0 %490
      %494 = vset.pattern.permute.xlu0 0
      %495 = vperm.xlu0 %494, %v444
      %v496 = vpop.permute.xlu0 %495
      %499 = vset.pattern.permute.xlu0 0
      %500 = vperm.xlu0 %499, %v445
      %v501 = vpop.permute.xlu0 %500
      %504 = vset.pattern.permute.xlu0 0
      %505 = vperm.xlu0 %504, %v446
      %v506 = vpop.permute.xlu0 %505
      %509 = vset.pattern.permute.xlu0 0
      %510 = vperm.xlu0 %509, %v447
      %v511 = vpop.permute.xlu0 %510
      %514 = vset.pattern.permute.xlu0 0
      %515 = vperm.xlu0 %514, %v448
      %v516 = vpop.permute.xlu0 %515
      %519 = vset.pattern.permute.xlu0 0
      %520 = vperm.xlu0 %519, %v449
      %v521 = vpop.permute.xlu0 %520
      %524 = vset.pattern.permute.xlu0 0
      %525 = vperm.xlu0 %524, %v450
      %v526 = vpop.permute.xlu0 %525
      %529 = vset.pattern.permute.xlu0 0
      %530 = vperm.xlu0 %529, %v451
      %v531 = vpop.permute.xlu0 %530
      %534 = vset.pattern.permute.xlu0 0
      %535 = vperm.xlu0 %534, %v452
      %v536 = vpop.permute.xlu0 %535
      %539 = vset.pattern.permute.xlu0 0
      %540 = vperm.xlu0 %539, %v453
      %v541 = vpop.permute.xlu0 %540
      %544 = vset.pattern.permute.xlu0 0
      %545 = vperm.xlu0 %544, %v454
      %v546 = vpop.permute.xlu0 %545
      %549 = vset.pattern.permute.xlu0 0
      %550 = vperm.xlu0 %549, %v455
      %v551 = vpop.permute.xlu0 %550
      %554 = vset.pattern.permute.xlu0 0
      %555 = vperm.xlu0 %554, %v456
      %v556 = vpop.permute.xlu0 %555
      %559 = vset.pattern.permute.xlu0 0
      %560 = vperm.xlu0 %559, %v457
      %v561 = vpop.permute.xlu0 %560
      %564 = vset.pattern.permute.xlu0 0
      %565 = vperm.xlu0 %564, %v458
      %v566 = vpop.permute.xlu0 %565
      %569 = vset.pattern.permute.xlu0 0
      %570 = vperm.xlu0 %569, %v459
      %v571 = vpop.permute.xlu0 %570
      %574 = vset.pattern.permute.xlu0 0
      %575 = vperm.xlu0 %574, %v460
      %v576 = vpop.permute.xlu0 %575
      %579 = vset.pattern.permute.xlu0 0
      %580 = vperm.xlu0 %579, %v461
      %v581 = vpop.permute.xlu0 %580
      %584 = vset.pattern.permute.xlu0 0
      %585 = vperm.xlu0 %584, %v462
      %v586 = vpop.permute.xlu0 %585
      %589 = vset.pattern.permute.xlu0 0
      %590 = vperm.xlu0 %589, %v463
      %v591 = vpop.permute.xlu0 %590
      %594 = vset.pattern.permute.xlu0 0
      %595 = vperm.xlu0 %594, %v464
      %v596 = vpop.permute.xlu0 %595
      %599 = vset.pattern.permute.xlu0 0
      %600 = vperm.xlu0 %599, %v465
      %v601 = vpop.permute.xlu0 %600
      %604 = vset.pattern.permute.xlu0 0
      %605 = vperm.xlu0 %604, %v466
      %v606 = vpop.permute.xlu0 %605
      %609 = vset.pattern.permute.xlu0 0
      %610 = vperm.xlu0 %609, %v467
      %v611 = vpop.permute.xlu0 %610
      %614 = vset.pattern.permute.xlu0 0
      %615 = vperm.xlu0 %614, %v468
      %v616 = vpop.permute.xlu0 %615
      %619 = vset.pattern.permute.xlu0 0
      %620 = vperm.xlu0 %619, %v469
      %v621 = vpop.permute.xlu0 %620
      %624 = vset.pattern.permute.xlu0 0
      %625 = vperm.xlu0 %624, %v470
      %v626 = vpop.permute.xlu0 %625
      %629 = vset.pattern.permute.xlu0 0
      %630 = vperm.xlu0 %629, %v471
      %v631 = vpop.permute.xlu0 %630
      %v634 = vlaneseq
      %v635 = vshrl.u32 %v634, 7
      %v636 = vsub.s32 0, %v635
      %v637 = vrot.slane %v472, %v636
      %v639 = vmul.f32 %v476, %v637
      %v640 = vmul.f32 %v481, %v637
      %v641 = vmul.f32 %v486, %v637
      %v642 = vmul.f32 %v491, %v637
      %v643 = vmul.f32 %v496, %v637
      %v644 = vmul.f32 %v501, %v637
      %v645 = vmul.f32 %v506, %v637
      %v646 = vmul.f32 %v511, %v637
      %v647 = vmul.f32 %v516, %v637
      %v648 = vmul.f32 %v521, %v637
      %v649 = vmul.f32 %v526, %v637
      %v650 = vmul.f32 %v531, %v637
      %v651 = vmul.f32 %v536, %v637
      %v652 = vmul.f32 %v541, %v637
      %v653 = vmul.f32 %v546, %v637
      %v654 = vmul.f32 %v551, %v637
      %v655 = vmul.f32 %v556, %v637
      %v656 = vmul.f32 %v561, %v637
      %v657 = vmul.f32 %v566, %v637
      %v658 = vmul.f32 %v571, %v637
      %v659 = vmul.f32 %v576, %v637
      %v660 = vmul.f32 %v581, %v637
      %v661 = vmul.f32 %v586, %v637
      %v662 = vmul.f32 %v591, %v637
      %v663 = vmul.f32 %v596, %v637
      %v664 = vmul.f32 %v601, %v637
      %v665 = vmul.f32 %v606, %v637
      %v666 = vmul.f32 %v611, %v637
      %v667 = vmul.f32 %v616, %v637
      %v668 = vmul.f32 %v621, %v637
      %v669 = vmul.f32 %v626, %v637
      %v670 = vmul.f32 %v631, %v637
      %v671 = vmax.f32 %v639, 1e-08
      %v672 = vmax.f32 %v640, 1e-08
      %v673 = vmax.f32 %v641, 1e-08
      %v674 = vmax.f32 %v642, 1e-08
      %v675 = vmax.f32 %v643, 1e-08
      %v676 = vmax.f32 %v644, 1e-08
      %v677 = vmax.f32 %v645, 1e-08
      %v678 = vmax.f32 %v646, 1e-08
      %v679 = vmax.f32 %v647, 1e-08
      %v680 = vmax.f32 %v648, 1e-08
      %v681 = vmax.f32 %v649, 1e-08
      %v682 = vmax.f32 %v650, 1e-08
      %v683 = vmax.f32 %v651, 1e-08
      %v684 = vmax.f32 %v652, 1e-08
      %v685 = vmax.f32 %v653, 1e-08
      %v686 = vmax.f32 %v654, 1e-08
      %v687 = vmax.f32 %v655, 1e-08
      %v688 = vmax.f32 %v656, 1e-08
      %v689 = vmax.f32 %v657, 1e-08
      %v690 = vmax.f32 %v658, 1e-08
      %v691 = vmax.f32 %v659, 1e-08
      %v692 = vmax.f32 %v660, 1e-08
      %v693 = vmax.f32 %v661, 1e-08
      %v694 = vmax.f32 %v662, 1e-08
      %v695 = vmax.f32 %v663, 1e-08
      %v696 = vmax.f32 %v664, 1e-08
      %v697 = vmax.f32 %v665, 1e-08
      %v698 = vmax.f32 %v666, 1e-08
      %v699 = vmax.f32 %v667, 1e-08
      %v700 = vmax.f32 %v668, 1e-08
      %v701 = vmax.f32 %v669, 1e-08
      %v702 = vmax.f32 %v670, 1e-08
      %v703 = vld [vmem:[#allocation2] sm:$0xff]
      %v704 = vld [vmem:[#allocation2 + $0x8] sm:$0xff]
      %v705 = vld [vmem:[#allocation2 + $0x10] sm:$0xff]
      %v706 = vld [vmem:[#allocation2 + $0x18] sm:$0xff]
      %v707 = vld [vmem:[#allocation2 + $0x20] sm:$0xff]
      %v708 = vld [vmem:[#allocation2 + $0x28] sm:$0xff]
      %v709 = vld [vmem:[#allocation2 + $0x30] sm:$0xff]
      %v710 = vld [vmem:[#allocation2 + $0x38] sm:$0xff]
      %v711 = vld [vmem:[#allocation2 + $0x40] sm:$0xff]
      %v712 = vld [vmem:[#allocation2 + $0x48] sm:$0xff]
      %v713 = vld [vmem:[#allocation2 + $0x50] sm:$0xff]
      %v714 = vld [vmem:[#allocation2 + $0x58] sm:$0xff]
      %v715 = vld [vmem:[#allocation2 + $0x60] sm:$0xff]
      %v716 = vld [vmem:[#allocation2 + $0x68] sm:$0xff]
      %v717 = vld [vmem:[#allocation2 + $0x70] sm:$0xff]
      %v718 = vld [vmem:[#allocation2 + $0x78] sm:$0xff]
      %v719 = vld [vmem:[#allocation2 + $0x80] sm:$0xff]
      %v720 = vld [vmem:[#allocation2 + $0x88] sm:$0xff]
      %v721 = vld [vmem:[#allocation2 + $0x90] sm:$0xff]
      %v722 = vld [vmem:[#allocation2 + $0x98] sm:$0xff]
      %v723 = vld [vmem:[#allocation2 + $0xa0] sm:$0xff]
      %v724 = vld [vmem:[#allocation2 + $0xa8] sm:$0xff]
      %v725 = vld [vmem:[#allocation2 + $0xb0] sm:$0xff]
      %v726 = vld [vmem:[#allocation2 + $0xb8] sm:$0xff]
      %v727 = vld [vmem:[#allocation2 + $0xc0] sm:$0xff]
      %v728 = vld [vmem:[#allocation2 + $0xc8] sm:$0xff]
      %v729 = vld [vmem:[#allocation2 + $0xd0] sm:$0xff]
      %v730 = vld [vmem:[#allocation2 + $0xd8] sm:$0xff]
      %v731 = vld [vmem:[#allocation2 + $0xe0] sm:$0xff]
      %v732 = vld [vmem:[#allocation2 + $0xe8] sm:$0xff]
      %v733 = vld [vmem:[#allocation2 + $0xf0] sm:$0xff]
      %v734 = vld [vmem:[#allocation2 + $0xf8] sm:$0xff]
      %v735 = vrcp.pop %v671
      %v736 = vmul.f32 %v703, %v735
      %v737 = vrcp.pop %v672
      %v738 = vmul.f32 %v704, %v737
      %v739 = vrcp.pop %v673
      %v740 = vmul.f32 %v705, %v739
      %v741 = vrcp.pop %v674
      %v742 = vmul.f32 %v706, %v741
      %v743 = vrcp.pop %v675
      %v744 = vmul.f32 %v707, %v743
      %v745 = vrcp.pop %v676
      %v746 = vmul.f32 %v708, %v745
      %v747 = vrcp.pop %v677
      %v748 = vmul.f32 %v709, %v747
      %v749 = vrcp.pop %v678
      %v750 = vmul.f32 %v710, %v749
      %v751 = vrcp.pop %v679
      %v752 = vmul.f32 %v711, %v751
      %v753 = vrcp.pop %v680
      %v754 = vmul.f32 %v712, %v753
      %v755 = vrcp.pop %v681
      %v756 = vmul.f32 %v713, %v755
      %v757 = vrcp.pop %v682
      %v758 = vmul.f32 %v714, %v757
      %v759 = vrcp.pop %v683
      %v760 = vmul.f32 %v715, %v759
      %v761 = vrcp.pop %v684
      %v762 = vmul.f32 %v716, %v761
      %v763 = vrcp.pop %v685
      %v764 = vmul.f32 %v717, %v763
      %v765 = vrcp.pop %v686
      %v766 = vmul.f32 %v718, %v765
      %v767 = vrcp.pop %v687
      %v768 = vmul.f32 %v719, %v767
      %v769 = vrcp.pop %v688
      %v770 = vmul.f32 %v720, %v769
      %v771 = vrcp.pop %v689
      %v772 = vmul.f32 %v721, %v771
      %v773 = vrcp.pop %v690
      %v774 = vmul.f32 %v722, %v773
      %v775 = vrcp.pop %v691
      %v776 = vmul.f32 %v723, %v775
      %v777 = vrcp.pop %v692
      %v778 = vmul.f32 %v724, %v777
      %v779 = vrcp.pop %v693
      %v780 = vmul.f32 %v725, %v779
      %v781 = vrcp.pop %v694
      %v782 = vmul.f32 %v726, %v781
      %v783 = vrcp.pop %v695
      %v784 = vmul.f32 %v727, %v783
      %v785 = vrcp.pop %v696
      %v786 = vmul.f32 %v728, %v785
      %v787 = vrcp.pop %v697
      %v788 = vmul.f32 %v729, %v787
      %v789 = vrcp.pop %v698
      %v790 = vmul.f32 %v730, %v789
      %v791 = vrcp.pop %v699
      %v792 = vmul.f32 %v731, %v791
      %v793 = vrcp.pop %v700
      %v794 = vmul.f32 %v732, %v793
      %v795 = vrcp.pop %v701
      %v796 = vmul.f32 %v733, %v795
      %v797 = vrcp.pop %v702
      %v798 = vmul.f32 %v734, %v797
      %v799 = vmul.f32 %v736, 20.0
      %v800 = vmul.f32 %v738, 20.0
      %v801 = vmul.f32 %v740, 20.0
      %v802 = vmul.f32 %v742, 20.0
      %v803 = vmul.f32 %v744, 20.0
      %v804 = vmul.f32 %v746, 20.0
      %v805 = vmul.f32 %v748, 20.0
      %v806 = vmul.f32 %v750, 20.0
      %v807 = vmul.f32 %v752, 20.0
      %v808 = vmul.f32 %v754, 20.0
      %v809 = vmul.f32 %v756, 20.0
      %v810 = vmul.f32 %v758, 20.0
      %v811 = vmul.f32 %v760, 20.0
      %v812 = vmul.f32 %v762, 20.0
      %v813 = vmul.f32 %v764, 20.0
      %v814 = vmul.f32 %v766, 20.0
      %v815 = vmul.f32 %v768, 20.0
      %v816 = vmul.f32 %v770, 20.0
      %v817 = vmul.f32 %v772, 20.0
      %v818 = vmul.f32 %v774, 20.0
      %v819 = vmul.f32 %v776, 20.0
      %v820 = vmul.f32 %v778, 20.0
      %v821 = vmul.f32 %v780, 20.0
      %v822 = vmul.f32 %v782, 20.0
      %v823 = vmul.f32 %v784, 20.0
      %v824 = vmul.f32 %v786, 20.0
      %v825 = vmul.f32 %v788, 20.0
      %v826 = vmul.f32 %v790, 20.0
      %v827 = vmul.f32 %v792, 20.0
      %v828 = vmul.f32 %v794, 20.0
      %v829 = vmul.f32 %v796, 20.0
      %v830 = vmul.f32 %v798, 20.0
      %831 = vst [vmem:[#allocation6] sm:$0xff] %v799
      %832 = vst [vmem:[#allocation6 + $0x8] sm:$0xff] %v800
      %833 = vst [vmem:[#allocation6 + $0x10] sm:$0xff] %v801
      %834 = vst [vmem:[#allocation6 + $0x18] sm:$0xff] %v802
      %835 = vst [vmem:[#allocation6 + $0x20] sm:$0xff] %v803
      %836 = vst [vmem:[#allocation6 + $0x28] sm:$0xff] %v804
      %837 = vst [vmem:[#allocation6 + $0x30] sm:$0xff] %v805
      %838 = vst [vmem:[#allocation6 + $0x38] sm:$0xff] %v806
      %839 = vst [vmem:[#allocation6 + $0x40] sm:$0xff] %v807
      %840 = vst [vmem:[#allocation6 + $0x48] sm:$0xff] %v808
      %841 = vst [vmem:[#allocation6 + $0x50] sm:$0xff] %v809
      %842 = vst [vmem:[#allocation6 + $0x58] sm:$0xff] %v810
      %843 = vst [vmem:[#allocation6 + $0x60] sm:$0xff] %v811
      %844 = vst [vmem:[#allocation6 + $0x68] sm:$0xff] %v812
      %845 = vst [vmem:[#allocation6 + $0x70] sm:$0xff] %v813
      %846 = vst [vmem:[#allocation6 + $0x78] sm:$0xff] %v814
      %847 = vst [vmem:[#allocation6 + $0x80] sm:$0xff] %v815
      %848 = vst [vmem:[#allocation6 + $0x88] sm:$0xff] %v816
      %849 = vst [vmem:[#allocation6 + $0x90] sm:$0xff] %v817
      %850 = vst [vmem:[#allocation6 + $0x98] sm:$0xff] %v818
      %851 = vst [vmem:[#allocation6 + $0xa0] sm:$0xff] %v819
      %852 = vst [vmem:[#allocation6 + $0xa8] sm:$0xff] %v820
      %853 = vst [vmem:[#allocation6 + $0xb0] sm:$0xff] %v821
      %854 = vst [vmem:[#allocation6 + $0xb8] sm:$0xff] %v822
      %855 = vst [vmem:[#allocation6 + $0xc0] sm:$0xff] %v823
      %856 = vst [vmem:[#allocation6 + $0xc8] sm:$0xff] %v824
      %857 = vst [vmem:[#allocation6 + $0xd0] sm:$0xff] %v825
      %858 = vst [vmem:[#allocation6 + $0xd8] sm:$0xff] %v826
      %859 = vst [vmem:[#allocation6 + $0xe0] sm:$0xff] %v827
      %860 = vst [vmem:[#allocation6 + $0xe8] sm:$0xff] %v828
      %861 = vst [vmem:[#allocation6 + $0xf0] sm:$0xff] %v829
      %862 = vst [vmem:[#allocation6 + $0xf8] sm:$0xff] %v830
    $region29: #{tpu_custom_call.1} parent=1 // pred_fallthru
      _
    // Predicated region
    $region30: #{tpu_custom_call.1} parent=1 // pred_check
      _
    $region31: #{tpu_custom_call.1} parent=1 // pred_check_branch
      %864 = sbr.rel (0) target = $region33
    $region32: #{tpu_custom_call.1} parent=1 // pred_region
      %s866 = ssub.s32 4096, 4096
      %867 = vsyncadd [#allocation5], %s866
      %s868 = sshll.u32 [#allocation6], 4
      %s869 = int_to_ptr.vmem [resolvable:$true] %s868
      %874 = dma.vmem_to_hbm [thread:$0]  %s869, 4096, %s4, [#allocation5], 128, 128, 8
    $region33: #{tpu_custom_call.1} parent=1 // pred_fallthru
      _
    // Predicated region
    $region34: #{tpu_custom_call.1} parent=1 // pred_check
      _
    $region35: #{tpu_custom_call.1} parent=1 // pred_check_branch
      %876 = sbr.rel (0) target = $region37
    $region36: #{tpu_custom_call.1} parent=1 // pred_region
      %877 = dma.done [#allocation5], 4096
    $region37: #{tpu_custom_call.1} parent=1 // pred_fallthru
      _
    %878 = vsyncpa [#allocation4], 1
    %879 = vsyncpa [#allocation5], 1

</llo_original>
